<compile_context>
chip_gen: v6e
topology: v6e:2x2x1
jax: 0.10.0
libtpu: 0.0.40
codegen_flags: <defaults>
</compile_context>

<pallas_src>
import functools
import math

import numpy as np

import jax
import jax.numpy as jnp
from jax.experimental import pallas as pl
from jax.experimental.pallas import tpu as pltpu

LEAKY_SLOPE = 0.1
BN_EPS = 1e-5
LANE = 128
DEFAULT_TILE_M = 1024          # row-tile target (rows of the flattened NHWC map)
TILE_M_B0 = 2048               # larger tile for the biggest (b0-level) kernel
VMEM_LIMIT_BYTES = 48 * 1024 * 1024


def _leaky(y):
    return jnp.maximum(y, LEAKY_SLOPE * y)


# ----------------------------- Pallas kernels ---------------------------------
def _cbl_dual_kernel(x_ref, w_ref, b_ref, wu_ref, bu_ref, o_ref, ou_ref):
    """o = LeakyReLU(x @ w + b) (f32), ou = LeakyReLU(o @ wu + bu) (bf16).

    The second (up-branch) CBL is fused into the producer's epilogue so `o`
    is never re-read from HBM by a separate kernel."""
    x = x_ref[...].astype(jnp.bfloat16)
    y = jnp.dot(x, w_ref[...], preferred_element_type=jnp.float32) + b_ref[...]
    y = _leaky(y)
    o_ref[...] = y.astype(o_ref.dtype)
    z = jnp.dot(y.astype(jnp.bfloat16), wu_ref[...],
                preferred_element_type=jnp.float32) + bu_ref[...]
    ou_ref[...] = _leaky(z).astype(ou_ref.dtype)


def _cbl_cat_up_kernel(*refs, dual):
    """LeakyReLU( concat([x1, upsample2x(x2_lo)], ch) @ [w1; w2] + b ) without
    materializing the concat or the upsampled tensor.

      x1: (tm, C1)     high-res rows (f32, cast to bf16 here)
      x2: (tm//4, C2)  matching low-res rows (bf16)
      e : (tm, tm//4)  constant 0/1 nearest-neighbour row-expansion matrix

    The 1x1 conv commutes with nearest upsampling, so w2 is applied at low
    resolution (4x fewer FLOPs) and only the small partial product is
    row-replicated on the MXU (each row of `e` holds exactly one 1.0, so
    e @ y2 copies bf16 rows exactly).  With dual=True a second CBL (wu, bu) is
    applied to the activated tile and emitted as a bf16 side output (the next
    level's upsample-branch input)."""
    if dual:
        (x1_ref, x2_ref, e_ref, w1_ref, w2_ref, b_ref,
         wu_ref, bu_ref, o_ref, ou_ref) = refs
    else:
        x1_ref, x2_ref, e_ref, w1_ref, w2_ref, b_ref, o_ref = refs

    acc = jnp.dot(x1_ref[...].astype(jnp.bfloat16), w1_ref[...],
                  preferred_element_type=jnp.float32)
    y2 = jnp.dot(x2_ref[...], w2_ref[...],
                 preferred_element_type=jnp.float32).astype(jnp.bfloat16)
    acc = acc + jnp.dot(e_ref[...], y2, preferred_element_type=jnp.float32)
    y = _leaky(acc + b_ref[...])
    o_ref[...] = y.astype(o_ref.dtype)
    if dual:
        z = jnp.dot(y.astype(jnp.bfloat16), wu_ref[...],
                    preferred_element_type=jnp.float32) + bu_ref[...]
        ou_ref[...] = _leaky(z).astype(ou_ref.dtype)


# ----------------------------- Tiling helpers ---------------------------------
def _round_up(x, m):
    return ((x + m - 1) // m) * m


def _pick_tile_m(m, unit, target):
    """Row tile: a multiple of `unit`, at most ~`target`, preferring >= 2 grid
    steps (pipelining + v7x megacore sharding).  Callers zero-pad M up to a
    multiple of the returned tile, so M does not need to divide evenly."""
    tm_cap = max(unit, (target // unit) * unit)
    nsteps = max(1, -(-m // tm_cap))          # ceil
    if nsteps == 1 and m > unit:
        nsteps = 2
    return max(unit, _round_up(-(-m // nsteps), unit))


def _pad_rows(x, m_pad):
    m = x.shape[0]
    if m_pad == m:
        return x
    return jnp.pad(x, ((0, m_pad - m), (0, 0)))


# ----------------------------- Kernel wrappers --------------------------------
def cbl_1x1_dual(x_flat, w, b, wu, bu, *, tile_m=DEFAULT_TILE_M):
    """Fused CBL (f32 out) + following up-branch CBL (bf16 out) on (M, Cin) rows."""
    m, cin = x_flat.shape
    coutp = w.shape[1]
    cu = wu.shape[1]
    tm = _pick_tile_m(m, 16, tile_m)            # 16: bf16 side-output sublane tile
    m_pad = _round_up(m, tm)
    x_flat = _pad_rows(x_flat, m_pad)

    o, ou = pl.pallas_call(
        _cbl_dual_kernel,
        out_shape=(jax.ShapeDtypeStruct((m_pad, coutp), jnp.float32),
                   jax.ShapeDtypeStruct((m_pad, cu), jnp.bfloat16)),
        grid_spec=pltpu.PrefetchScalarGridSpec(
            num_scalar_prefetch=0,
            grid=(m_pad // tm,),
            in_specs=[
                pl.BlockSpec((tm, cin), lambda i: (i, 0)),     # activations tile
                pl.BlockSpec((cin, coutp), lambda i: (0, 0)),  # folded weight (bf16)
                pl.BlockSpec((1, coutp), lambda i: (0, 0)),    # folded BN bias (f32)
                pl.BlockSpec((coutp, cu), lambda i: (0, 0)),   # up-branch weight
                pl.BlockSpec((1, cu), lambda i: (0, 0)),       # up-branch bias
            ],
            out_specs=(pl.BlockSpec((tm, coutp), lambda i: (i, 0)),
                       pl.BlockSpec((tm, cu), lambda i: (i, 0))),
        ),
        compiler_params=pltpu.CompilerParams(
            dimension_semantics=("parallel",),
            vmem_limit_bytes=VMEM_LIMIT_BYTES),
    )(x_flat, w, b, wu, bu)
    return o[:m], ou[:m]


def cbl_cat_upsample2(x1_flat, x2_lo_flat, w1, w2, b, *, w_hi,
                      wu=None, bu=None, tile_m=DEFAULT_TILE_M):
    """LeakyReLU( concat([x1, Upsample2x_nearest(x2_lo)], ch) @ [w1; w2] + b ),
    optionally followed by a fused second CBL (wu, bu) emitted as a bf16 output.

    x1_flat:    (M_hi, C1)    NHWC-flattened high-res backbone features (f32).
    x2_lo_flat: (M_hi//4, C2) NHWC-flattened low-res branch features (bf16).
    w_hi:       width W of the high-res feature map (pixels per image row).
    """
    m_hi, c1 = x1_flat.shape
    m_lo, c2 = x2_lo_flat.shape
    assert m_lo * 4 == m_hi and w_hi % 2 == 0
    coutp = w1.shape[1]
    dual = wu is not None

    # Tiles cover whole pairs of high-res image rows so the matching low-res
    # rows form one contiguous block; tm % 64 keeps the (tm//4)-row bf16 block
    # and any bf16 side output 16-sublane aligned.
    unit = math.lcm(2 * w_hi, 64)
    tm = _pick_tile_m(m_hi, unit, tile_m)
    tl = tm // 4
    m_pad = _round_up(m_hi, tm)
    x1_flat = _pad_rows(x1_flat, m_pad)
    x2_lo_flat = _pad_rows(x2_lo_flat, m_pad // 4)

    # Constant tile-local nearest-neighbour row-replication matrix.  Constant
    # index_map => DMA'd from HBM only once for the whole grid.
    rr = np.arange(tm)
    lo = (rr // (2 * w_hi)) * (w_hi // 2) + (rr % w_hi) // 2
    e = jnp.asarray(lo[:, None] == np.arange(tl)[None, :], dtype=jnp.bfloat16)

    in_specs = [
        pl.BlockSpec((tm, c1), lambda i: (i, 0)),        # high-res tile
        pl.BlockSpec((tl, c2), lambda i: (i, 0)),        # low-res tile
        pl.BlockSpec((tm, tl), lambda i: (0, 0)),        # expansion matrix
        pl.BlockSpec((c1, coutp), lambda i: (0, 0)),     # weight, backbone part
        pl.BlockSpec((c2, coutp), lambda i: (0, 0)),     # weight, upsampled part
        pl.BlockSpec((1, coutp), lambda i: (0, 0)),      # bias
    ]
    args = [x1_flat, x2_lo_flat, e, w1, w2, b]
    out_shape = jax.ShapeDtypeStruct((m_pad, coutp), jnp.float32)
    out_specs = pl.BlockSpec((tm, coutp), lambda i: (i, 0))
    if dual:
        cu = wu.shape[1]
        in_specs += [pl.BlockSpec((coutp, cu), lambda i: (0, 0)),
                     pl.BlockSpec((1, cu), lambda i: (0, 0))]
        args += [wu, bu]
        out_shape = (out_shape, jax.ShapeDtypeStruct((m_pad, cu), jnp.bfloat16))
        out_specs = (out_specs, pl.BlockSpec((tm, cu), lambda i: (i, 0)))

    res = pl.pallas_call(
        functools.partial(_cbl_cat_up_kernel, dual=dual),
        out_shape=out_shape,
        grid_spec=pltpu.PrefetchScalarGridSpec(
            num_scalar_prefetch=0,
            grid=(m_pad // tm,),
            in_specs=in_specs,
            out_specs=out_specs,
        ),
        compiler_params=pltpu.CompilerParams(
            dimension_semantics=("parallel",),
            vmem_limit_bytes=VMEM_LIMIT_BYTES),
    )(*args)
    if dual:
        return res[0][:m_hi], res[1][:m_hi]
    return res[:m_hi]


# ----------------------------- Parameters -------------------------------------
def init_cbl(key, cin, cout):
    """Conv2d(cin, cout, 1, bias=False) + BatchNorm2d (inference) parameters,
    with the BN scale pre-folded into the conv weight:  y = x @ w + b."""
    kw, kg, kb, km, kv = jax.random.split(key, 5)
    w = jax.random.normal(kw, (cin, cout), jnp.float32) / jnp.sqrt(jnp.float32(cin))
    gamma = 1.0 + 0.1 * jax.random.normal(kg, (cout,), jnp.float32)
    beta = 0.1 * jax.random.normal(kb, (cout,), jnp.float32)
    mean = 0.1 * jax.random.normal(km, (cout,), jnp.float32)
    var = jnp.abs(jax.random.normal(kv, (cout,), jnp.float32)) + 0.5
    scale = gamma / jnp.sqrt(var + BN_EPS)
    return {"w": w * scale[None, :], "b": beta - mean * scale}


def init_neck(key, scale=1):
    k1, k2, k3, k4, k5 = jax.random.split(key, 5)
    return {
        "seq1": init_cbl(k1, 384 // scale, 128 // scale),
        "seq2": init_cbl(k2, 768 // scale, 256 // scale),
        "seq3": init_cbl(k3, 1024 // scale, 512 // scale),
        "up1": init_cbl(k4, 256 // scale, 128 // scale),
        "up2": init_cbl(k5, 512 // scale, 256 // scale),
    }


def _prep_single(layer, cin_pad=None):
    """bf16 weight, rows optionally zero-padded to `cin_pad` (for padded-channel
    inputs), cols zero-padded to a lane multiple; f32 (1, Coutp) bias."""
    w, b = layer["w"], layer["b"]
    cin, cout = w.shape
    coutp = _round_up(cout, LANE)
    if cin_pad is not None and cin_pad > cin:
        w = jnp.pad(w, ((0, cin_pad - cin), (0, 0)))
    if coutp > cout:
        w = jnp.pad(w, ((0, 0), (0, coutp - cout)))
        b = jnp.pad(b, (0, coutp - cout))
    return {"w": w.astype(jnp.bfloat16), "b": b.reshape(1, coutp)}


def _prep_split(layer, c_first, cin2_pad):
    """Split a concat-consuming CBL weight into the backbone part (first
    `c_first` input channels) and the upsampled part; pad like _prep_single."""
    w, b = layer["w"], layer["b"]
    cout = w.shape[1]
    coutp = _round_up(cout, LANE)
    w1, w2 = w[:c_first], w[c_first:]
    if cin2_pad > w2.shape[0]:
        w2 = jnp.pad(w2, ((0, cin2_pad - w2.shape[0]), (0, 0)))
    if coutp > cout:
        w1 = jnp.pad(w1, ((0, 0), (0, coutp - cout)))
        w2 = jnp.pad(w2, ((0, 0), (0, coutp - cout)))
        b = jnp.pad(b, (0, coutp - cout))
    return {"w1": w1.astype(jnp.bfloat16), "w2": w2.astype(jnp.bfloat16),
            "b": b.reshape(1, coutp)}


def prepare_neck_params(raw):
    """Fold / cast / pad the raw parameters into kernel-ready form."""
    c3_out = raw["seq3"]["w"].shape[1]          # n3 channels
    c2_out = raw["seq2"]["w"].shape[1]          # n2 channels
    c1_out = raw["seq1"]["w"].shape[1]          # n1 channels
    c2u_out = raw["up2"]["w"].shape[1]          # up2-CBL output channels
    c1u_out = raw["up1"]["w"].shape[1]          # up1-CBL output channels
    c_b1 = raw["seq2"]["w"].shape[0] - c2u_out  # backbone[1] channels
    c_b0 = raw["seq1"]["w"].shape[0] - c1u_out  # backbone[0] channels
    return {
        "seq3": _prep_single(raw["seq3"]),
        "up2": _prep_single(raw["up2"], cin_pad=_round_up(c3_out, LANE)),
        "seq2": _prep_split(raw["seq2"], c_b1, _round_up(c2u_out, LANE)),
        "up1": _prep_single(raw["up1"], cin_pad=_round_up(c2_out, LANE)),
        "seq1": _prep_split(raw["seq1"], c_b0, _round_up(c1u_out, LANE)),
        "meta": {"couts": (c1_out, c2_out, c3_out)},
    }


# ----------------------------- Forward pass -----------------------------------
def neck_forward_nhwc(kp, backbone_nhwc):
    """backbone_nhwc = [b0, b1, b2] NHWC feature maps (4S, 2S, S spatial)."""
    b0, b1, b2 = backbone_nhwc
    n, h0, w0, c0 = b0.shape
    _, h1, w1, c1 = b1.shape
    _, h2, w2, c2 = b2.shape
    assert (h1, w1) == (2 * h2, 2 * w2) and (h0, w0) == (2 * h1, 2 * w1)
    c1_out, c2_out, c3_out = kp["meta"]["couts"]

    # n3 = seq3(b2) (f32, padded channels) and u2 = CBL part of up2(n3)
    # (bf16, low resolution) produced by a single fused dual-output kernel.
    n3p, u2 = cbl_1x1_dual(b2.reshape(n * h2 * w2, c2),
                           kp["seq3"]["w"], kp["seq3"]["b"],
                           kp["up2"]["w"], kp["up2"]["b"])
    # n2 = seq2(cat([b1, Upsample2x(u2)])) with the concat + upsample fused
    # in-kernel, plus the fused u1 = CBL part of up1(n2) as a bf16 side output.
    n2p, u1 = cbl_cat_upsample2(b1.reshape(n * h1 * w1, c1), u2,
                                kp["seq2"]["w1"], kp["seq2"]["w2"], kp["seq2"]["b"],
                                w_hi=w1, wu=kp["up1"]["w"], bu=kp["up1"]["b"])
    # n1 = seq1(cat([b0, Upsample2x(u1)]))
    n1p = cbl_cat_upsample2(b0.reshape(n * h0 * w0, c0), u1,
                            kp["seq1"]["w1"], kp["seq1"]["w2"], kp["seq1"]["b"],
                            w_hi=w0, tile_m=TILE_M_B0)

    n1 = n1p.reshape(n, h0, w0, -1)[..., :c1_out]
    n2 = n2p.reshape(n, h1, w1, -1)[..., :c2_out]
    n3 = n3p.reshape(n, h2, w2, -1)[..., :c3_out]
    return [n1, n2, n3]


def neck_forward(kp, backbone_output_nchw):
    """NCHW interface matching the PyTorch module.  If the surrounding graph is
    already NHWC, call neck_forward_nhwc directly and skip these transposes."""
    nhwc = [jnp.transpose(x, (0, 2, 3, 1)) for x in backbone_output_nchw]
    outs = neck_forward_nhwc(kp, nhwc)
    return [jnp.transpose(t, (0, 3, 1, 2)) for t in outs]


# Pure-JAX reference mirroring the kernel math (same bf16 casts, same low-res
# partial-product upsample) for a correctness sanity check.  It deviates from
# a pure-f32 PyTorch Neck only at ~bf16 matmul precision, which is inherent to
# the bf16-MXU design.
def upsample2_nearest(x_nhwc):
    # nn.Upsample(scale_factor=2), default mode='nearest'
    return jnp.repeat(jnp.repeat(x_nhwc, 2, axis=1), 2, axis=2)


def _ref_cbl(x, w, b):
    y = jnp.einsum("nhwc,cd->nhwd", x.astype(jnp.bfloat16), w,
                   preferred_element_type=jnp.float32) + b[0]
    return jnp.maximum(y, LEAKY_SLOPE * y)


def _ref_cat_up(x_hi, u_lo, w1, w2, b):
    # 1x1 conv commutes with nearest upsample: conv at low res, then upsample.
    # Mirrors the kernel's bf16 rounding of the low-res partial product.
    y2 = jnp.einsum("nhwc,cd->nhwd", u_lo, w2,
                    preferred_element_type=jnp.float32).astype(jnp.bfloat16)
    y2 = upsample2_nearest(y2).astype(jnp.float32)
    acc = jnp.einsum("nhwc,cd->nhwd", x_hi.astype(jnp.bfloat16), w1,
                     preferred_element_type=jnp.float32)
    y = acc + y2 + b[0]
    return jnp.maximum(y, LEAKY_SLOPE * y)


def neck_forward_ref(kp, backbone_output_nchw):
    b0, b1, b2 = [jnp.transpose(x, (0, 2, 3, 1)) for x in backbone_output_nchw]
    c1_out, c2_out, c3_out = kp["meta"]["couts"]

    n3 = _ref_cbl(b2, kp["seq3"]["w"], kp["seq3"]["b"])
    u2 = _ref_cbl(n3, kp["up2"]["w"], kp["up2"]["b"]).astype(jnp.bfloat16)
    n2 = _ref_cat_up(b1, u2, kp["seq2"]["w1"], kp["seq2"]["w2"], kp["seq2"]["b"])
    u1 = _ref_cbl(n2, kp["up1"]["w"], kp["up1"]["b"]).astype(jnp.bfloat16)
    n1 = _ref_cat_up(b0, u1, kp["seq1"]["w1"], kp["seq1"]["w2"], kp["seq1"]["b"])

    outs = [n1[..., :c1_out], n2[..., :c2_out], n3[..., :c3_out]]
    return [jnp.transpose(t, (0, 3, 1, 2)) for t in outs]


# ----------------------------- Main -------------------------------------------
if __name__ == "__main__":
    scale = 8          # channel-scale factor of the module (keeps shapes small)
    N = 2              # batch
    S = 4              # smallest spatial size (feature map of backbone_output[2])

    key = jax.random.PRNGKey(0)
    kparam, k0, k1, k2 = jax.random.split(key, 4)
    kp = prepare_neck_params(init_neck(kparam, scale=scale))

    # Backbone feature maps (NCHW), channels implied by the concat arithmetic:
    #   b0: 256//scale ch @ 4S, b1: 512//scale ch @ 2S, b2: 1024//scale ch @ S
    b0 = jax.random.normal(k0, (N, 256 // scale, 4 * S, 4 * S), jnp.float32)
    b1 = jax.random.normal(k1, (N, 512 // scale, 2 * S, 2 * S), jnp.float32)
    b2 = jax.random.normal(k2, (N, 1024 // scale, S, S), jnp.float32)
    backbone_output = [b0, b1, b2]

    outs = neck_forward(kp, backbone_output)
    outs = [jax.block_until_ready(o) for o in outs]

    refs = neck_forward_ref(kp, backbone_output)
    for o, r in zip(outs, refs):
        assert o.shape == r.shape and o.dtype == r.dtype
        assert jnp.allclose(o, r, rtol=1e-3, atol=2e-3), "mismatch vs reference"

    assert outs[0].shape == (N, 128 // scale, 4 * S, 4 * S)
    assert outs[1].shape == (N, 256 // scale, 2 * S, 2 * S)
    assert outs[2].shape == (N, 512 // scale, S, S)

    print("KERNEL_OK")
</pallas_src>

<mosaic_0001>
module attributes {stable_mosaic.version = 11 : i64} {
  func.func @_cbl_dual_kernel(%arg0: i32, %arg1: memref<16x128xf32, #tpu.memory_space<vmem>>, %arg2: memref<128x128xbf16, #tpu.memory_space<vmem>>, %arg3: memref<1x128xf32, #tpu.memory_space<vmem>>, %arg4: memref<128x128xbf16, #tpu.memory_space<vmem>>, %arg5: memref<1x128xf32, #tpu.memory_space<vmem>>, %arg6: memref<16x128xf32, #tpu.memory_space<vmem>>, %arg7: memref<16x128xbf16, #tpu.memory_space<vmem>>) attributes {dimension_semantics = [#tpu.dimension_semantics<parallel>], iteration_bounds = array<i64: 2>, scalar_prefetch = 0 : i64, scratch_operands = 0 : i64, tpu.core_type = #tpu.core_type<tc>, window_params = [{transform_indices = @transform_0, window_bounds = array<i64: 16, 128>}, {pipeline_mode = #tpu.pipeline_mode<synchronous>, transform_indices = @transform_1, window_bounds = array<i64: 128, 128>}, {pipeline_mode = #tpu.pipeline_mode<synchronous>, transform_indices = @transform_2, window_bounds = array<i64: 1, 128>}, {pipeline_mode = #tpu.pipeline_mode<synchronous>, transform_indices = @transform_3, window_bounds = array<i64: 128, 128>}, {pipeline_mode = #tpu.pipeline_mode<synchronous>, transform_indices = @transform_4, window_bounds = array<i64: 1, 128>}, {transform_indices = @transform_5, window_bounds = array<i64: 16, 128>}, {transform_indices = @transform_6, window_bounds = array<i64: 16, 128>}]} {
    %c0 = arith.constant 0 : index
    %c0_0 = arith.constant 0 : index
    %0 = vector.load %arg1[%c0, %c0_0] : memref<16x128xf32, #tpu.memory_space<vmem>>, vector<16x128xf32>
    %1 = arith.truncf %0 : vector<16x128xf32> to vector<16x128xbf16>
    %c0_1 = arith.constant 0 : index
    %c0_2 = arith.constant 0 : index
    %2 = vector.load %arg2[%c0_1, %c0_2] : memref<128x128xbf16, #tpu.memory_space<vmem>>, vector<128x128xbf16>
    %cst = arith.constant dense<0.000000e+00> : vector<16x128xf32>
    %3 = tpu.matmul %1, %2, %cst {dimension_numbers = #tpu.dot_dimension_numbers<[1], [0], [0], [1], [0, 0, 1, 1], [], []>} : vector<16x128xbf16>, vector<128x128xbf16>, vector<16x128xf32> -> vector<16x128xf32>
    %c0_3 = arith.constant 0 : index
    %c0_4 = arith.constant 0 : index
    %4 = vector.load %arg3[%c0_3, %c0_4] : memref<1x128xf32, #tpu.memory_space<vmem>>, vector<1x128xf32>
    %5 = vector.broadcast %4 : vector<1x128xf32> to vector<16x128xf32>
    %6 = arith.addf %3, %5 : vector<16x128xf32>
    %cst_5 = arith.constant 1.000000e-01 : f32
    %7 = vector.broadcast %cst_5 : f32 to vector<16x128xf32>
    %8 = arith.mulf %7, %6 : vector<16x128xf32>
    %9 = arith.maximumf %6, %8 : vector<16x128xf32>
    %c0_6 = arith.constant 0 : index
    %c0_7 = arith.constant 0 : index
    %10 = vector.load %arg6[%c0_6, %c0_7] : memref<16x128xf32, #tpu.memory_space<vmem>>, vector<16x128xf32>
    tpu.vector_store %arg6[%c0_6, %c0_7], %9 {strides = array<i32>} : memref<16x128xf32, #tpu.memory_space<vmem>>, vector<16x128xf32>,
    %11 = arith.truncf %9 : vector<16x128xf32> to vector<16x128xbf16>
    %c0_8 = arith.constant 0 : index
    %c0_9 = arith.constant 0 : index
    %12 = vector.load %arg4[%c0_8, %c0_9] : memref<128x128xbf16, #tpu.memory_space<vmem>>, vector<128x128xbf16>
    %cst_10 = arith.constant dense<0.000000e+00> : vector<16x128xf32>
    %13 = tpu.matmul %11, %12, %cst_10 {dimension_numbers = #tpu.dot_dimension_numbers<[1], [0], [0], [1], [0, 0, 1, 1], [], []>} : vector<16x128xbf16>, vector<128x128xbf16>, vector<16x128xf32> -> vector<16x128xf32>
    %c0_11 = arith.constant 0 : index
    %c0_12 = arith.constant 0 : index
    %14 = vector.load %arg5[%c0_11, %c0_12] : memref<1x128xf32, #tpu.memory_space<vmem>>, vector<1x128xf32>
    %15 = vector.broadcast %14 : vector<1x128xf32> to vector<16x128xf32>
    %16 = arith.addf %13, %15 : vector<16x128xf32>
    %cst_13 = arith.constant 1.000000e-01 : f32
    %17 = vector.broadcast %cst_13 : f32 to vector<16x128xf32>
    %18 = arith.mulf %17, %16 : vector<16x128xf32>
    %19 = arith.maximumf %16, %18 : vector<16x128xf32>
    %20 = arith.truncf %19 : vector<16x128xf32> to vector<16x128xbf16>
    %c0_14 = arith.constant 0 : index
    %c0_15 = arith.constant 0 : index
    %21 = vector.load %arg7[%c0_14, %c0_15] : memref<16x128xbf16, #tpu.memory_space<vmem>>, vector<16x128xbf16>
    tpu.vector_store %arg7[%c0_14, %c0_15], %20 {strides = array<i32>} : memref<16x128xbf16, #tpu.memory_space<vmem>>, vector<16x128xbf16>,
    return
  }
  func.func @transform_0(%arg0: i32) -> (i32, i32) {
    %c0_i32 = arith.constant 0 : i32
    %c0_i32_0 = arith.constant 0 : i32
    return %arg0, %c0_i32 : i32, i32
  }
  func.func @transform_1(%arg0: i32) -> (i32, i32) {
    %c0_i32 = arith.constant 0 : i32
    %c0_i32_0 = arith.constant 0 : i32
    %c0_i32_1 = arith.constant 0 : i32
    return %c0_i32, %c0_i32_0 : i32, i32
  }
  func.func @transform_2(%arg0: i32) -> (i32, i32) {
    %c0_i32 = arith.constant 0 : i32
    %c0_i32_0 = arith.constant 0 : i32
    %c0_i32_1 = arith.constant 0 : i32
    return %c0_i32, %c0_i32_0 : i32, i32
  }
  func.func @transform_3(%arg0: i32) -> (i32, i32) {
    %c0_i32 = arith.constant 0 : i32
    %c0_i32_0 = arith.constant 0 : i32
    %c0_i32_1 = arith.constant 0 : i32
    return %c0_i32, %c0_i32_0 : i32, i32
  }
  func.func @transform_4(%arg0: i32) -> (i32, i32) {
    %c0_i32 = arith.constant 0 : i32
    %c0_i32_0 = arith.constant 0 : i32
    %c0_i32_1 = arith.constant 0 : i32
    return %c0_i32, %c0_i32_0 : i32, i32
  }
  func.func @transform_5(%arg0: i32) -> (i32, i32) {
    %c0_i32 = arith.constant 0 : i32
    %c0_i32_0 = arith.constant 0 : i32
    return %arg0, %c0_i32 : i32, i32
  }
  func.func @transform_6(%arg0: i32) -> (i32, i32) {
    %c0_i32 = arith.constant 0 : i32
    %c0_i32_0 = arith.constant 0 : i32
    return %arg0, %c0_i32 : i32, i32
  }
}

</mosaic_0001>

<llo_original>
// kernel: tpu_custom_call.1
$region0: #{tpu_custom_call.1}
  #allocation0 [shape = 'u32[]', space=smem, size = 0x4, offset = 0x4, fixed_abs, tag = 'smem constant byte address 0x4 - core index']
  #allocation1 [shape = 'u32[144,128]{1,0:T(1,128)}', space=vmem, size = 0x12000, scoped, tag = 'internal scratch']
  %s0 = inlined_call_operand.hbm [shape: f32[32,128], index: 0, kind: input, shape index: {}]
  %s1 = inlined_call_operand.hbm [shape: bf16[128,128], index: 1, kind: input, shape index: {}]
  %s2 = inlined_call_operand.vmem [shape: f32[1,128], index: 2, kind: input, shape index: {}]
  %s3 = inlined_call_operand.hbm [shape: bf16[128,128], index: 3, kind: input, shape index: {}]
  %s4 = inlined_call_operand.vmem [shape: f32[1,128], index: 4, kind: input, shape index: {}]
  %s5 = inlined_call_operand.hbm [shape: f32[32,128], index: 5, kind: output, shape index: {0}]
  %s6 = inlined_call_operand.hbm [shape: bf16[32,128], index: 6, kind: output, shape index: {1}]
  %7 = xla_tuple %s5, %s6
  %s8 = sld [smem:[#allocation0]]
  $region73: #{tpu_custom_call.1} parent=0
    _
  %s10 = ssub.s32 1, %s8
  %s11 = scalar_select 0, %s10, %s8
  $region1: #{tpu_custom_call.1} parent=0
    #allocation2 [shape = 'u8[16384]{0}', space=vmem, size = 0x4000, scoped, tag = 'input window, operand 0']
    #allocation3 [shape = 's32[2]{0}', space=sflag, size = 0x8, scoped, tag = 'scoped memory for tpu_custom_call.1']
    #allocation4 [shape = 's32[2]{0}', space=sflag, size = 0x8, scoped, tag = 'scoped memory for tpu_custom_call.1']
    #allocation5 [shape = 'u8[32768]{0}', space=vmem, size = 0x8000, scoped, tag = 'input window, operand 1, single buffered']
    #allocation6 [shape = 's32[1]{0}', space=sflag, size = 0x4, scoped, tag = 'scoped memory for tpu_custom_call.1']
    #allocation7 [shape = 'u8[32768]{0}', space=vmem, size = 0x8000, scoped, tag = 'input window, operand 3, single buffered']
    #allocation8 [shape = 'u8[16384]{0}', space=vmem, size = 0x4000, scoped, tag = 'output window, operand 0']
    #allocation9 [shape = 'u8[8192]{0}', space=vmem, size = 0x2000, scoped, tag = 'output window, operand 1']
    #allocation10 [shape = 's32[2]{0}', space=sflag, size = 0x8, scoped, tag = 'scoped memory for tpu_custom_call.1']
    %12 = vsyncpa [#allocation3], 0
    %s13 = scalar_lea.sflag [#allocation3], 1
    %14 = vsyncpa %s13, 0
    %15 = vsyncpa [#allocation6], 0
    %16 = vsyncpa [#allocation4], 0
    %s17 = scalar_lea.sflag [#allocation4], 1
    %18 = vsyncpa %s17, 0
    %19 = vsyncpa [#allocation10], 0
    %s20 = scalar_lea.sflag [#allocation10], 1
    %21 = vsyncpa %s20, 0
    loop: start=0, step=1, limit=4
    $region2: #{tpu_custom_call.1} parent=1 // loop_pre_header
      _
    $region3: #{tpu_custom_call.1} parent=1 // loop_header
      %s23 = sphi 0, %s27
      %p24 = scmp.ge.s32.totalorder %s23, 4
      %s33 = sphi 0, %s35
      %s36 = sphi 0, %s33
      %s37 = sphi 0, %s36
      %s53 = sphi 0, %s37
      %s57 = sphi 0, %s57
      %s59 = sphi 0, %s57
      %s60 = sphi 0, %s59
      %s74 = sphi 0, %s60
      %s78 = sphi 0, %s78
      %s80 = sphi 0, %s78
      %s81 = sphi 0, %s80
      %s95 = sphi 0, %s81
      %s99 = sphi 0, %s99
      %s101 = sphi 0, %s99
      %s102 = sphi 0, %s101
      %s116 = sphi 0, %s102
      %s120 = sphi 0, %s120
      %s122 = sphi 0, %s120
      %s123 = sphi 0, %s122
      %s137 = sphi 0, %s123
      %s143 = sphi 0, %s145
      %s146 = sphi 0, %s143
      %s147 = sphi 0, %s146
      %s163 = sphi 0, %s147
      %s169 = sphi 0, %s171
      %s172 = sphi 0, %s169
      %s173 = sphi 0, %s172
      %s189 = sphi 0, %s173
    $region4: #{tpu_custom_call.1} parent=1 // loop_header_branch
      %26 = sbr.rel (%p24) target = $region8
    $region5: #{tpu_custom_call.1} parent=1 // loop_body
      %s28 = ssub.s32 %s23, 1
      %s29 = ssub.s32 %s23, 2
      %s30 = sadd.s32 %s23, 1
      %s31 = ssub.s32 %s23, %s30
      %p32 = scmp.eq.s32.totalorder %s31, 0
      %s34 = sadd.s32 %s33, 1
      %s35 = scalar_select %p32, %s33, %s34
      %p38 = pneg %p32
      %p39 = scmp.eq.s32.totalorder %s23, 1
      %p40 = por %p38, %p39
      %p41 = scmp.ne.s32.totalorder %s33, %s36
      %p42 = scmp.eq.s32.totalorder %s23, 0
      %p43 = por %p41, %p42
      %p44 = scmp.ne.s32.totalorder %s33, %s36
      %p45 = scmp.eq.s32.totalorder %s28, 1
      %p46 = por %p44, %p45
      %p47 = scmp.ne.s32.totalorder %s36, %s37
      %p48 = scmp.eq.s32.totalorder %s28, 0
      %p49 = por %p47, %p48
      %p50 = scmp.ne.s32.totalorder %s36, %s37
      %p51 = scmp.eq.s32.totalorder %s29, 1
      %p52 = por %p50, %p51
      %p54 = scmp.ne.s32.totalorder %s37, %s53
      %p55 = scmp.eq.s32.totalorder %s29, 0
      %p56 = por %p54, %p55
      %s58 = sadd.s32 %s57, 1
      %p61 = scmp.eq.s32.totalorder %s23, 1
      %p62 = scmp.ne.s32.totalorder %s57, %s59
      %p63 = scmp.eq.s32.totalorder %s23, 0
      %p64 = por %p62, %p63
      %p65 = scmp.ne.s32.totalorder %s57, %s59
      %p66 = scmp.eq.s32.totalorder %s28, 1
      %p67 = por %p65, %p66
      %p68 = scmp.ne.s32.totalorder %s59, %s60
      %p69 = scmp.eq.s32.totalorder %s28, 0
      %p70 = por %p68, %p69
      %p71 = scmp.ne.s32.totalorder %s59, %s60
      %p72 = scmp.eq.s32.totalorder %s29, 1
      %p73 = por %p71, %p72
      %p75 = scmp.ne.s32.totalorder %s60, %s74
      %p76 = scmp.eq.s32.totalorder %s29, 0
      %p77 = por %p75, %p76
      %s79 = sadd.s32 %s78, 1
      %p82 = scmp.eq.s32.totalorder %s23, 1
      %p83 = scmp.ne.s32.totalorder %s78, %s80
      %p84 = scmp.eq.s32.totalorder %s23, 0
      %p85 = por %p83, %p84
      %p86 = scmp.ne.s32.totalorder %s78, %s80
      %p87 = scmp.eq.s32.totalorder %s28, 1
      %p88 = por %p86, %p87
      %p89 = scmp.ne.s32.totalorder %s80, %s81
      %p90 = scmp.eq.s32.totalorder %s28, 0
      %p91 = por %p89, %p90
      %p92 = scmp.ne.s32.totalorder %s80, %s81
      %p93 = scmp.eq.s32.totalorder %s29, 1
      %p94 = por %p92, %p93
      %p96 = scmp.ne.s32.totalorder %s81, %s95
      %p97 = scmp.eq.s32.totalorder %s29, 0
      %p98 = por %p96, %p97
      %s100 = sadd.s32 %s99, 1
      %p103 = scmp.eq.s32.totalorder %s23, 1
      %p104 = scmp.ne.s32.totalorder %s99, %s101
      %p105 = scmp.eq.s32.totalorder %s23, 0
      %p106 = por %p104, %p105
      %p107 = scmp.ne.s32.totalorder %s99, %s101
      %p108 = scmp.eq.s32.totalorder %s28, 1
      %p109 = por %p107, %p108
      %p110 = scmp.ne.s32.totalorder %s101, %s102
      %p111 = scmp.eq.s32.totalorder %s28, 0
      %p112 = por %p110, %p111
      %p113 = scmp.ne.s32.totalorder %s101, %s102
      %p114 = scmp.eq.s32.totalorder %s29, 1
      %p115 = por %p113, %p114
      %p117 = scmp.ne.s32.totalorder %s102, %s116
      %p118 = scmp.eq.s32.totalorder %s29, 0
      %p119 = por %p117, %p118
      %s121 = sadd.s32 %s120, 1
      %p124 = scmp.eq.s32.totalorder %s23, 1
      %p125 = scmp.ne.s32.totalorder %s120, %s122
      %p126 = scmp.eq.s32.totalorder %s23, 0
      %p127 = por %p125, %p126
      %p128 = scmp.ne.s32.totalorder %s120, %s122
      %p129 = scmp.eq.s32.totalorder %s28, 1
      %p130 = por %p128, %p129
      %p131 = scmp.ne.s32.totalorder %s122, %s123
      %p132 = scmp.eq.s32.totalorder %s28, 0
      %p133 = por %p131, %p132
      %p134 = scmp.ne.s32.totalorder %s122, %s123
      %p135 = scmp.eq.s32.totalorder %s29, 1
      %p136 = por %p134, %p135
      %p138 = scmp.ne.s32.totalorder %s123, %s137
      %p139 = scmp.eq.s32.totalorder %s29, 0
      %p140 = por %p138, %p139
      %s141 = ssub.s32 %s23, %s30
      %p142 = scmp.eq.s32.totalorder %s141, 0
      %s144 = sadd.s32 %s143, 1
      %s145 = scalar_select %p142, %s143, %s144
      %p148 = pneg %p142
      %p149 = scmp.eq.s32.totalorder %s23, 1
      %p150 = por %p148, %p149
      %p151 = scmp.ne.s32.totalorder %s143, %s146
      %p152 = scmp.eq.s32.totalorder %s23, 0
      %p153 = por %p151, %p152
      %p154 = scmp.ne.s32.totalorder %s143, %s146
      %p155 = scmp.eq.s32.totalorder %s28, 1
      %p156 = por %p154, %p155
      %p157 = scmp.ne.s32.totalorder %s146, %s147
      %p158 = scmp.eq.s32.totalorder %s28, 0
      %p159 = por %p157, %p158
      %p160 = scmp.ne.s32.totalorder %s146, %s147
      %p161 = scmp.eq.s32.totalorder %s29, 1
      %p162 = por %p160, %p161
      %p164 = scmp.ne.s32.totalorder %s147, %s163
      %p165 = scmp.eq.s32.totalorder %s29, 0
      %p166 = por %p164, %p165
      %s167 = ssub.s32 %s23, %s30
      %p168 = scmp.eq.s32.totalorder %s167, 0
      %s170 = sadd.s32 %s169, 1
      %s171 = scalar_select %p168, %s169, %s170
      %p174 = pneg %p168
      %p175 = scmp.eq.s32.totalorder %s23, 1
      %p176 = por %p174, %p175
      %p177 = scmp.ne.s32.totalorder %s169, %s172
      %p178 = scmp.eq.s32.totalorder %s23, 0
      %p179 = por %p177, %p178
      %p180 = scmp.ne.s32.totalorder %s169, %s172
      %p181 = scmp.eq.s32.totalorder %s28, 1
      %p182 = por %p180, %p181
      %p183 = scmp.ne.s32.totalorder %s172, %s173
      %p184 = scmp.eq.s32.totalorder %s28, 0
      %p185 = por %p183, %p184
      %p186 = scmp.ne.s32.totalorder %s172, %s173
      %p187 = scmp.eq.s32.totalorder %s29, 1
      %p188 = por %p186, %p187
      %p190 = scmp.ne.s32.totalorder %s173, %s189
      %p191 = scmp.eq.s32.totalorder %s29, 0
      %p192 = por %p190, %p191
      %p193 = scmp.le.s32.totalorder 1, %s23
      %p194 = scmp.lt.s32.totalorder %s23, 3
      %p195 = pnand %p193, %p194
      %p196 = pneg %p195
      // Predicated region
      $region9: #{tpu_custom_call.1} parent=5 // pred_check
        _
      $region10: #{tpu_custom_call.1} parent=5 // pred_check_branch
        %198 = sbr.rel (%p195) target = $region12
      $region11: #{tpu_custom_call.1} parent=5 // pred_region
        %s199 = ssub.s32 %s23, 1
        // Predicated region
        $region13: #{tpu_custom_call.1} parent=11 // pred_check
          %p200 = pneg %p70
        $region14: #{tpu_custom_call.1} parent=11 // pred_check_branch
          %202 = sbr.rel (%p200) target = $region16
        $region15: #{tpu_custom_call.1} parent=11 // pred_region
          %s204 = ssub.s32 1024, 1024
          %205 = vsyncadd [#allocation6], %s204
          %s206 = sshll.u32 [#allocation5], 4
          %s207 = int_to_ptr.vmem [resolvable:$true] %s206
          %212 = dma.hbm_to_vmem [thread:$0]  %s1, 1024, %s207, [#allocation6], 64, 64, 4
        $region16: #{tpu_custom_call.1} parent=11 // pred_fallthru
          _
        // Predicated region
        $region17: #{tpu_custom_call.1} parent=11 // pred_check
          %p213 = pneg %p91
        $region18: #{tpu_custom_call.1} parent=11 // pred_check_branch
          %215 = sbr.rel (%p213) target = $region20
        $region19: #{tpu_custom_call.1} parent=11 // pred_region
          _
        $region20: #{tpu_custom_call.1} parent=11 // pred_fallthru
          _
        // Predicated region
        $region21: #{tpu_custom_call.1} parent=11 // pred_check
          %p216 = pneg %p112
        $region22: #{tpu_custom_call.1} parent=11 // pred_check_branch
          %218 = sbr.rel (%p216) target = $region24
        $region23: #{tpu_custom_call.1} parent=11 // pred_region
          %s220 = ssub.s32 1024, 1024
          %221 = vsyncadd [#allocation6], %s220
          %s222 = sshll.u32 [#allocation7], 4
          %s223 = int_to_ptr.vmem [resolvable:$true] %s222
          %228 = dma.hbm_to_vmem [thread:$0]  %s3, 1024, %s223, [#allocation6], 64, 64, 4
        $region24: #{tpu_custom_call.1} parent=11 // pred_fallthru
          _
        // Predicated region
        $region25: #{tpu_custom_call.1} parent=11 // pred_check
          %p229 = pneg %p133
        $region26: #{tpu_custom_call.1} parent=11 // pred_check_branch
          %231 = sbr.rel (%p229) target = $region28
        $region27: #{tpu_custom_call.1} parent=11 // pred_region
          _
        $region28: #{tpu_custom_call.1} parent=11 // pred_fallthru
          _
      $region12: #{tpu_custom_call.1} parent=5 // pred_fallthru
        _
      %p232 = scmp.lt.s32.totalorder %s23, 2
      // Predicated region
      $region29: #{tpu_custom_call.1} parent=5 // pred_check
        %p233 = pneg %p232
      $region30: #{tpu_custom_call.1} parent=5 // pred_check_branch
        %235 = sbr.rel (%p233) target = $region32
      $region31: #{tpu_custom_call.1} parent=5 // pred_region
        // Predicated region
        $region33: #{tpu_custom_call.1} parent=31 // pred_check
          %p236 = pneg %p43
        $region34: #{tpu_custom_call.1} parent=31 // pred_check_branch
          %238 = sbr.rel (%p236) target = $region36
        $region35: #{tpu_custom_call.1} parent=31 // pred_region
          %s239 = sand.u32 %s33, 1
          %s240 = scalar_lea.sflag [#allocation3], %s239
          %s241 = sand.u32 %s33, 1
          %s242 = smul.addr %s241, 16
          %s243 = scalar_lea.vmem [#allocation2], %s242
          %s244 = smul.u32 2, %s23
          %s246 = ssub.s32 256, 256
          %247 = vsyncadd %s240, %s246
          %s248 = smul.addr %s244, 128
          %s249 = scalar_lea.hbm %s0, %s248
          %s250 = sshll.u32 %s243, 4
          %s251 = int_to_ptr.vmem [resolvable:$true] %s250
          %256 = dma.hbm_to_vmem [thread:$0]  %s249, 256, %s251, %s240, 128, 128, 8
        $region36: #{tpu_custom_call.1} parent=31 // pred_fallthru
          _
      $region32: #{tpu_custom_call.1} parent=5 // pred_fallthru
        _
      %p257 = scmp.le.s32.totalorder 1, %s23
      %p258 = scmp.lt.s32.totalorder %s23, 3
      %p259 = pnand %p257, %p258
      %p260 = pneg %p259
      // Predicated region
      $region37: #{tpu_custom_call.1} parent=5 // pred_check
        _
      $region38: #{tpu_custom_call.1} parent=5 // pred_check_branch
        %262 = sbr.rel (%p259) target = $region40
      $region39: #{tpu_custom_call.1} parent=5 // pred_region
        %s263 = ssub.s32 %s23, 1
        %s264 = sand.u32 %s36, 1
        %s265 = scalar_lea.sflag [#allocation3], %s264
        %s266 = sand.u32 %s36, 1
        %s267 = smul.addr %s266, 16
        %s268 = scalar_lea.vmem [#allocation2], %s267
        // Predicated region
        $region41: #{tpu_custom_call.1} parent=39 // pred_check
          %p269 = pneg %p49
        $region42: #{tpu_custom_call.1} parent=39 // pred_check_branch
          %271 = sbr.rel (%p269) target = $region44
        $region43: #{tpu_custom_call.1} parent=39 // pred_region
          %272 = dma.done %s265, 256
        $region44: #{tpu_custom_call.1} parent=39 // pred_fallthru
          _
        // Predicated region
        $region45: #{tpu_custom_call.1} parent=39 // pred_check
          %p273 = pneg %p70
        $region46: #{tpu_custom_call.1} parent=39 // pred_check_branch
          %275 = sbr.rel (%p273) target = $region48
        $region47: #{tpu_custom_call.1} parent=39 // pred_region
          %276 = dma.done [#allocation6], 1024
        $region48: #{tpu_custom_call.1} parent=39 // pred_fallthru
          _
        // Predicated region
        $region49: #{tpu_custom_call.1} parent=39 // pred_check
          %p277 = pneg %p112
        $region50: #{tpu_custom_call.1} parent=39 // pred_check_branch
          %279 = sbr.rel (%p277) target = $region52
        $region51: #{tpu_custom_call.1} parent=39 // pred_region
          %280 = dma.done [#allocation6], 1024
        $region52: #{tpu_custom_call.1} parent=39 // pred_fallthru
          _
        %s281 = sand.u32 %s36, 1
        %s282 = scalar_lea.sflag [#allocation3], %s281
        %s283 = sand.u32 %s36, 1
        %s284 = smul.addr %s283, 16
        %s285 = scalar_lea.vmem [#allocation2], %s284
        %p286 = pneg %p49
        %p287 = pneg %p46
        %p288 = pneg %p70
        %p289 = pneg %p67
        %p290 = pneg %p91
        %p291 = pneg %p88
        %p292 = pneg %p112
        %p293 = pneg %p109
        %p294 = pneg %p133
        %p295 = pneg %p130
        %p296 = pneg %p159
        %p297 = pneg %p156
        %s298 = sand.u32 %s146, 1
        %s299 = scalar_lea.sflag [#allocation4], %s298
        %s300 = sand.u32 %s146, 1
        %s301 = smul.addr %s300, 16
        %s302 = scalar_lea.vmem [#allocation8], %s301
        %p303 = pneg %p185
        %p304 = pneg %p182
        %s305 = sand.u32 %s172, 1
        %s306 = scalar_lea.sflag [#allocation10], %s305
        %s307 = sand.u32 %s172, 1
        %s308 = smul.addr %s307, 8
        %s309 = scalar_lea.vmem [#allocation9], %s308
        %s310 = smul.u32 2, %s28
        %s311 = smul.u32 2, %s28
        %s312 = smul.u32 2, %s28
        %v314 = vld [vmem:[%s268] sm:$0xff]
        %v315 = vld [vmem:[%s268 + $0x8] sm:$0xff]
        %v316 = vpack.c.bf16 %v315, %v314
        %v317 = vld [vmem:[#allocation5] sm:$0xf]
        %v318 = vld [vmem:[#allocation5 + $0x4] sm:$0xf]
        %v319 = vld [vmem:[#allocation5 + $0x8] sm:$0xf]
        %v320 = vld [vmem:[#allocation5 + $0xc] sm:$0xf]
        %v321 = vld [vmem:[#allocation5 + $0x10] sm:$0xf]
        %v322 = vld [vmem:[#allocation5 + $0x14] sm:$0xf]
        %v323 = vld [vmem:[#allocation5 + $0x18] sm:$0xf]
        %v324 = vld [vmem:[#allocation5 + $0x1c] sm:$0xf]
        %v325 = vld [vmem:[#allocation5 + $0x20] sm:$0xf]
        %v326 = vld [vmem:[#allocation5 + $0x24] sm:$0xf]
        %v327 = vld [vmem:[#allocation5 + $0x28] sm:$0xf]
        %v328 = vld [vmem:[#allocation5 + $0x2c] sm:$0xf]
        %v329 = vld [vmem:[#allocation5 + $0x30] sm:$0xf]
        %v330 = vld [vmem:[#allocation5 + $0x34] sm:$0xf]
        %v331 = vld [vmem:[#allocation5 + $0x38] sm:$0xf]
        %v332 = vld [vmem:[#allocation5 + $0x3c] sm:$0xf]
        %v333 = vld [vmem:[%s2] sm:$0x1]
        %v335 = vlaneseq
        %v336 = vshrl.u32 %v335, 7
        %v337 = vsub.s32 0, %v336
        %v338 = vrot.slane %v333, %v337
        %v356 = vunpack.c.l.b16 %v317
        %v357 = vunpack.c.l.b16 %v318
        %v358 = vunpack.c.l.b16 %v319
        %v359 = vunpack.c.l.b16 %v320
        %v360 = vunpack.c.l.b16 %v321
        %v361 = vunpack.c.l.b16 %v322
        %v362 = vunpack.c.l.b16 %v323
        %v363 = vunpack.c.l.b16 %v324
        %v364 = vunpack.c.l.b16 %v325
        %v365 = vunpack.c.l.b16 %v326
        %v366 = vunpack.c.l.b16 %v327
        %v367 = vunpack.c.l.b16 %v328
        %v368 = vunpack.c.l.b16 %v329
        %v369 = vunpack.c.l.b16 %v330
        %v370 = vunpack.c.l.b16 %v331
        %v371 = vunpack.c.l.b16 %v332
        %v372 = vpack.c.b16 %v357, %v356
        %v373 = vpack.c.b16 %v359, %v358
        %v374 = vpack.c.b16 %v361, %v360
        %v375 = vpack.c.b16 %v363, %v362
        %v376 = vpack.c.b16 %v365, %v364
        %v377 = vpack.c.b16 %v367, %v366
        %v378 = vpack.c.b16 %v369, %v368
        %v379 = vpack.c.b16 %v371, %v370
        %388 = vmatprep.subr.bf16.mxu0 0
        %389 = vmatpush1.bf16.msra.mxu0 %v379
        %390 = vmatprep.subr.bf16.mxu0 0
        %391 = vmatpush1.bf16.msra.mxu0 %v378
        %392 = vmatprep.subr.bf16.mxu0 0
        %393 = vmatpush1.bf16.msra.mxu0 %v377
        %394 = vmatprep.subr.bf16.mxu0 0
        %395 = vmatpush1.bf16.msra.mxu0 %v376
        %396 = vmatprep.subr.bf16.mxu0 0
        %397 = vmatpush1.bf16.msra.mxu0 %v375
        %398 = vmatprep.subr.bf16.mxu0 0
        %399 = vmatpush1.bf16.msra.mxu0 %v374
        %400 = vmatprep.subr.bf16.mxu0 0
        %401 = vmatpush1.bf16.msra.mxu0 %v373
        %402 = vmatprep.subr.bf16.mxu0 0
        %403 = vmatpush1.bf16.msra.mxu0 %v372
        %404 = vmatprep.subr.bf16.mxu0 0
        %405 = vmatpush2.bf16.msra.mxu0 0
        %406 = vmatprep.subr.bf16.mxu0 0
        %407 = vmatpush2.bf16.msra.mxu0 0
        %408 = vmatprep.subr.bf16.mxu0 0
        %409 = vmatpush2.bf16.msra.mxu0 0
        %410 = vmatprep.subr.bf16.mxu0 0
        %411 = vmatpush2.bf16.msra.mxu0 0
        %412 = vmatprep.subr.bf16.mxu0 0
        %413 = vmatpush2.bf16.msra.mxu0 0
        %414 = vmatprep.subr.bf16.mxu0 0
        %415 = vmatpush2.bf16.msra.mxu0 0
        %416 = vmatprep.subr.bf16.mxu0 0
        %417 = vmatpush2.bf16.msra.mxu0 0
        %418 = vmatprep.subr.bf16.mxu0 0
        %419 = vmatpush2.bf16.msra.mxu0 0
        %420 = vmatprep.mubr.bf16.mxu0 0
        %421 = vmatmul.mubr.bf16.gmra.mxu0 %v316
        %v422 = vpop.f32.mrf.mxu0
        %v423 = vadd.f32 %v338, %v422
        %v424 = vpop.f32.mrf.mxu0
        %v425 = vpop.f32.mrf.mxu0
        %v426 = vadd.f32 %v338, %v425
        %v427 = vpop.f32.mrf.mxu0
        %428 = vdwg.mxu0
        %v429 = vmul.f32 %v423, 0.1
        %v430 = vmul.f32 %v426, 0.1
        %v431 = vmax.f32 %v423, %v429
        %v432 = vmax.f32 %v426, %v430
        %433 = vst [vmem:[%s302] sm:$0xff] %v431
        %434 = vst [vmem:[%s302 + $0x8] sm:$0xff] %v432
        %v435 = vpack.c.bf16 %v432, %v431
        %v436 = vld [vmem:[#allocation7] sm:$0xf]
        %v437 = vld [vmem:[#allocation7 + $0x4] sm:$0xf]
        %v438 = vld [vmem:[#allocation7 + $0x8] sm:$0xf]
        %v439 = vld [vmem:[#allocation7 + $0xc] sm:$0xf]
        %v440 = vld [vmem:[#allocation7 + $0x10] sm:$0xf]
        %v441 = vld [vmem:[#allocation7 + $0x14] sm:$0xf]
        %v442 = vld [vmem:[#allocation7 + $0x18] sm:$0xf]
        %v443 = vld [vmem:[#allocation7 + $0x1c] sm:$0xf]
        %v444 = vld [vmem:[#allocation7 + $0x20] sm:$0xf]
        %v445 = vld [vmem:[#allocation7 + $0x24] sm:$0xf]
        %v446 = vld [vmem:[#allocation7 + $0x28] sm:$0xf]
        %v447 = vld [vmem:[#allocation7 + $0x2c] sm:$0xf]
        %v448 = vld [vmem:[#allocation7 + $0x30] sm:$0xf]
        %v449 = vld [vmem:[#allocation7 + $0x34] sm:$0xf]
        %v450 = vld [vmem:[#allocation7 + $0x38] sm:$0xf]
        %v451 = vld [vmem:[#allocation7 + $0x3c] sm:$0xf]
        %v452 = vld [vmem:[%s4] sm:$0x1]
        %v454 = vlaneseq
        %v455 = vshrl.u32 %v454, 7
        %v456 = vsub.s32 0, %v455
        %v457 = vrot.slane %v452, %v456
        %v475 = vunpack.c.l.b16 %v436
        %v476 = vunpack.c.l.b16 %v437
        %v477 = vunpack.c.l.b16 %v438
        %v478 = vunpack.c.l.b16 %v439
        %v479 = vunpack.c.l.b16 %v440
        %v480 = vunpack.c.l.b16 %v441
        %v481 = vunpack.c.l.b16 %v442
        %v482 = vunpack.c.l.b16 %v443
        %v483 = vunpack.c.l.b16 %v444
        %v484 = vunpack.c.l.b16 %v445
        %v485 = vunpack.c.l.b16 %v446
        %v486 = vunpack.c.l.b16 %v447
        %v487 = vunpack.c.l.b16 %v448
        %v488 = vunpack.c.l.b16 %v449
        %v489 = vunpack.c.l.b16 %v450
        %v490 = vunpack.c.l.b16 %v451
        %v491 = vpack.c.b16 %v476, %v475
        %v492 = vpack.c.b16 %v478, %v477
        %v493 = vpack.c.b16 %v480, %v479
        %v494 = vpack.c.b16 %v482, %v481
        %v495 = vpack.c.b16 %v484, %v483
        %v496 = vpack.c.b16 %v486, %v485
        %v497 = vpack.c.b16 %v488, %v487
        %v498 = vpack.c.b16 %v490, %v489
        %507 = vmatprep.subr.bf16.mxu0 0
        %508 = vmatpush1.bf16.msra.mxu0 %v498
        %509 = vmatprep.subr.bf16.mxu0 0
        %510 = vmatpush1.bf16.msra.mxu0 %v497
        %511 = vmatprep.subr.bf16.mxu0 0
        %512 = vmatpush1.bf16.msra.mxu0 %v496
        %513 = vmatprep.subr.bf16.mxu0 0
        %514 = vmatpush1.bf16.msra.mxu0 %v495
        %515 = vmatprep.subr.bf16.mxu0 0
        %516 = vmatpush1.bf16.msra.mxu0 %v494
        %517 = vmatprep.subr.bf16.mxu0 0
        %518 = vmatpush1.bf16.msra.mxu0 %v493
        %519 = vmatprep.subr.bf16.mxu0 0
        %520 = vmatpush1.bf16.msra.mxu0 %v492
        %521 = vmatprep.subr.bf16.mxu0 0
        %522 = vmatpush1.bf16.msra.mxu0 %v491
        %523 = vmatprep.subr.bf16.mxu0 0
        %524 = vmatpush2.bf16.msra.mxu0 0
        %525 = vmatprep.subr.bf16.mxu0 0
        %526 = vmatpush2.bf16.msra.mxu0 0
        %527 = vmatprep.subr.bf16.mxu0 0
        %528 = vmatpush2.bf16.msra.mxu0 0
        %529 = vmatprep.subr.bf16.mxu0 0
        %530 = vmatpush2.bf16.msra.mxu0 0
        %531 = vmatprep.subr.bf16.mxu0 0
        %532 = vmatpush2.bf16.msra.mxu0 0
        %533 = vmatprep.subr.bf16.mxu0 0
        %534 = vmatpush2.bf16.msra.mxu0 0
        %535 = vmatprep.subr.bf16.mxu0 0
        %536 = vmatpush2.bf16.msra.mxu0 0
        %537 = vmatprep.subr.bf16.mxu0 0
        %538 = vmatpush2.bf16.msra.mxu0 0
        %539 = vmatprep.mubr.bf16.mxu0 0
        %540 = vmatmul.mubr.bf16.gmra.mxu0 %v435
        %v541 = vpop.f32.mrf.mxu0
        %v542 = vadd.f32 %v457, %v541
        %v543 = vpop.f32.mrf.mxu0
        %v544 = vpop.f32.mrf.mxu0
        %v545 = vadd.f32 %v457, %v544
        %v546 = vpop.f32.mrf.mxu0
        %547 = vdwg.mxu0
        %v548 = vmul.f32 %v542, 0.1
        %v549 = vmul.f32 %v545, 0.1
        %v550 = vmax.f32 %v542, %v548
        %v551 = vmax.f32 %v545, %v549
        %v552 = vpack.c.bf16 %v551, %v550
        %v554 = vunpack.c.l.b16 %v552
        %v555 = vunpack.c.h.b16 %v552
        %v556 = vpack.c.b16 %v554, %v554
        %v557 = vpack.c.b16 %v555, %v555
        %560 = vst [vmem:[%s309] sm:$0xf] %v556
        %561 = vst [vmem:[%s309 + $0x4] sm:$0xf] %v557
        %s562 = sand.u32 %s146, 1
        %s563 = scalar_lea.sflag [#allocation4], %s562
        %s564 = sand.u32 %s146, 1
        %s565 = smul.addr %s564, 16
        %s566 = scalar_lea.vmem [#allocation8], %s565
        %s567 = sand.u32 %s172, 1
        %s568 = scalar_lea.sflag [#allocation10], %s567
        %s569 = sand.u32 %s172, 1
        %s570 = smul.addr %s569, 8
        %s571 = scalar_lea.vmem [#allocation9], %s570
        // Predicated region
        $region53: #{tpu_custom_call.1} parent=39 // pred_check
          %p572 = pneg %p156
        $region54: #{tpu_custom_call.1} parent=39 // pred_check_branch
          %574 = sbr.rel (%p572) target = $region56
        $region55: #{tpu_custom_call.1} parent=39 // pred_region
          %s575 = smul.u32 2, %s28
          %s577 = ssub.s32 256, 256
          %578 = vsyncadd %s563, %s577
          %s579 = smul.addr %s575, 128
          %s580 = scalar_lea.hbm %s5, %s579
          %s581 = sshll.u32 %s566, 4
          %s582 = int_to_ptr.vmem [resolvable:$true] %s581
          %587 = dma.vmem_to_hbm [thread:$0]  %s582, 256, %s580, %s563, 128, 128, 8
        $region56: #{tpu_custom_call.1} parent=39 // pred_fallthru
          _
        // Predicated region
        $region57: #{tpu_custom_call.1} parent=39 // pred_check
          %p588 = pneg %p182
        $region58: #{tpu_custom_call.1} parent=39 // pred_check_branch
          %590 = sbr.rel (%p588) target = $region60
        $region59: #{tpu_custom_call.1} parent=39 // pred_region
          %s591 = smul.u32 2, %s28
          %s593 = ssub.s32 128, 128
          %594 = vsyncadd %s568, %s593
          %s595 = smul.addr %s591, 64
          %s596 = scalar_lea.hbm %s6, %s595
          %s597 = sshll.u32 %s571, 4
          %s598 = int_to_ptr.vmem [resolvable:$true] %s597
          %603 = dma.vmem_to_hbm [thread:$0]  %s598, 128, %s596, %s568, 64, 64, 4
        $region60: #{tpu_custom_call.1} parent=39 // pred_fallthru
          _
      $region40: #{tpu_custom_call.1} parent=5 // pred_fallthru
        _
      %p604 = scmp.le.s32.totalorder 2, %s23
      // Predicated region
      $region61: #{tpu_custom_call.1} parent=5 // pred_check
        %p605 = pneg %p604
      $region62: #{tpu_custom_call.1} parent=5 // pred_check_branch
        %607 = sbr.rel (%p605) target = $region64
      $region63: #{tpu_custom_call.1} parent=5 // pred_region
        %s608 = ssub.s32 %s23, 2
        // Predicated region
        $region65: #{tpu_custom_call.1} parent=63 // pred_check
          %p609 = pneg %p162
        $region66: #{tpu_custom_call.1} parent=63 // pred_check_branch
          %611 = sbr.rel (%p609) target = $region68
        $region67: #{tpu_custom_call.1} parent=63 // pred_region
          %s612 = sand.u32 %s147, 1
          %s613 = scalar_lea.sflag [#allocation4], %s612
          %s614 = sand.u32 %s147, 1
          %s615 = smul.addr %s614, 16
          %s616 = scalar_lea.vmem [#allocation8], %s615
          %617 = dma.done %s613, 256
        $region68: #{tpu_custom_call.1} parent=63 // pred_fallthru
          _
        // Predicated region
        $region69: #{tpu_custom_call.1} parent=63 // pred_check
          %p618 = pneg %p188
        $region70: #{tpu_custom_call.1} parent=63 // pred_check_branch
          %620 = sbr.rel (%p618) target = $region72
        $region71: #{tpu_custom_call.1} parent=63 // pred_region
          %s621 = sand.u32 %s173, 1
          %s622 = scalar_lea.sflag [#allocation10], %s621
          %s623 = sand.u32 %s173, 1
          %s624 = smul.addr %s623, 8
          %s625 = scalar_lea.vmem [#allocation9], %s624
          %626 = dma.done %s622, 128
        $region72: #{tpu_custom_call.1} parent=63 // pred_fallthru
          _
      $region64: #{tpu_custom_call.1} parent=5 // pred_fallthru
        _
    $region6: #{tpu_custom_call.1} parent=1 // loop_footer
      %s27 = sadd.s32 1, %s23
    $region7: #{tpu_custom_call.1} parent=1 // loop_footer_branch
      %22 = sbr.rel target = $region3
    $region8: #{tpu_custom_call.1} parent=1 // loop_exit
      _
    %627 = vsyncpa [#allocation3], 1
    %s628 = scalar_lea.sflag [#allocation3], 1
    %629 = vsyncpa %s628, 1
    %630 = vsyncpa [#allocation6], 1
    %631 = vsyncpa [#allocation4], 1
    %s632 = scalar_lea.sflag [#allocation4], 1
    %633 = vsyncpa %s632, 1
    %634 = vsyncpa [#allocation10], 1
    %s635 = scalar_lea.sflag [#allocation10], 1
    %636 = vsyncpa %s635, 1

</llo_original>
